<compile_context>
chip_gen: v5e
topology: v5e:2x2
jax: 0.10.0
libtpu: 0.0.40
codegen_flags: <defaults>
</compile_context>

<pallas_src>
import math

import numpy as np
import jax
import jax.numpy as jnp
from jax.experimental import pallas as pl
from jax.experimental.pallas import tpu as pltpu


def _moment_matrix(l):
    # M[i, :] = (arange(l) - (l-1)//2)**i / factorial(i)  (same centering as _MK)
    grid = np.arange(l, dtype=np.float64) - (l - 1) // 2
    M = np.zeros((l, l), dtype=np.float64)
    for i in range(l):
        M[i] = grid ** i / math.factorial(i)
    return M


def _kron_operator(shape):
    # W such that out_flat = x_flat @ W, i.e. W = kron(M0, M1).T (built in f64).
    l0, l1 = shape
    return np.kron(_moment_matrix(l0), _moment_matrix(l1)).T


def _round_up(a, b):
    return ((a + b - 1) // b) * b


def _k2m_kernel(x_ref, wt_ref, o_ref):
    # x_ref : (tb, Pp)   pack kernels per row, lane-dense
    # wt_ref: (Pp, Pp)   block-diagonal kron(M0,M1).T, resident in VMEM
    # One MXU matmul per batch tile; f32 accumulation regardless of input dtype.
    y = jnp.dot(x_ref[...], wt_ref[...], preferred_element_type=jnp.float32)
    o_ref[...] = y.astype(o_ref.dtype)


def k2m(k, shape, *, tb=4096, min_pallas_rows=256, force_pallas=False):
    """Pallas K2M forward. k: array with k.shape[-2:] == shape (2-D case)."""
    assert len(shape) == 2, "this Pallas implementation covers 2-D kernel shapes"
    # TODO(synk): N-D (>2 spatial axes) K2M needs one left-contraction per axis;
    #             only the 2-D kernel-shape path is implemented here.
    l0, l1 = shape
    assert tuple(k.shape[-2:]) == (l0, l1)
    sizek = k.shape
    P = l0 * l1

    # _packdim: flatten leading dims to a batch axis, spatial dims to the lane axis.
    x = k.reshape((-1, P))
    B = x.shape[0]

    w64 = _kron_operator(shape)  # (P, P) float64

    # ---- small-batch fast path: launch/step overhead dominates, let XLA fuse ----
    if B < min_pallas_rows and not force_pallas:
        w = jnp.asarray(w64, jnp.float32)
        out = (x.astype(jnp.float32) @ w).astype(k.dtype)
        return out.reshape(sizek)

    # ---- lane packing: `pack` flattened kernels side by side on the lane axis ---
    max_pack = max(1, 128 // P)
    pack = max_pack
    if B % pack:
        # Prefer a pad-free pack if B has a reasonably large divisor <= max_pack
        # (avoids an extra full copy of x for the zero-pad).
        div = next((p for p in range(max_pack, 0, -1) if B % p == 0), 1)
        if div * 2 >= max_pack:
            pack = div
    Bp = _round_up(B, pack)
    if Bp != B:
        # Zero rows are sliced off after the call; rows stay independent because
        # the packed operator is block-diagonal.
        x = jnp.concatenate([x, jnp.zeros((Bp - B, P), x.dtype)], axis=0)
    rows = Bp // pack
    Pp = pack * P
    x = x.reshape((rows, Pp))  # contiguous row-major reshape: free

    # Block-diagonal operator: `pack` copies of kron(M0,M1).T on the diagonal.
    wbd = np.zeros((Pp, Pp), dtype=np.float64)
    for s in range(pack):
        wbd[s * P:(s + 1) * P, s * P:(s + 1) * P] = w64
    # bf16 inputs: native bf16 x bf16 MXU dot (f32 accumulation) halves HBM traffic.
    w_dtype = jnp.bfloat16 if k.dtype == jnp.bfloat16 else jnp.float32
    w = jnp.asarray(wbd, dtype=w_dtype)

    # ---- batch tile selection (VMEM accounting with lane padding to 128) -------
    itemsize = int(jnp.dtype(k.dtype).itemsize)
    lanes = _round_up(Pp, 128)                 # actual VMEM lane width of a tile row
    op_bytes = 2 * lanes * lanes * int(jnp.dtype(w_dtype).itemsize)
    tb = max(8, (min(int(tb), 1 << 15) // 8) * 8)
    # Keep >= 2 grid steps whenever possible so the "parallel" batch axis shards
    # across both v7x TensorCores (harmless on single-core v5e/v6e).
    tb = min(tb, max(8, _round_up(pl.cdiv(rows, 2), 8)))
    # VMEM budget: 2x double-buffered (input + output) tiles + operator <= ~24 MiB,
    # comfortably under v7x's 64 MiB physical / 32 MiB scoped VMEM.
    budget = 24 << 20
    max_tb = max(8, (((budget - op_bytes) // (4 * lanes * itemsize)) // 8) * 8)
    tb = min(tb, max_tb)
    grid_b = pl.cdiv(rows, tb)   # partial last block: masked writeback, rows independent

    flops = 2 * rows * Pp * Pp
    bytes_accessed = (2 * rows * Pp + Pp * Pp) * itemsize

    out = pl.pallas_call(
        _k2m_kernel,
        out_shape=jax.ShapeDtypeStruct((rows, Pp), k.dtype),
        grid=(grid_b,),
        in_specs=[
            # batch-tiled rows: tb % 8 == 0, last dim == full extent Pp
            pl.BlockSpec((tb, Pp), lambda i: (i, 0)),
            # small resident operator; block index constant -> DMA'd once
            pl.BlockSpec((Pp, Pp), lambda i: (0, 0)),
        ],
        out_specs=pl.BlockSpec((tb, Pp), lambda i: (i, 0)),
        compiler_params=pltpu.CompilerParams(
            dimension_semantics=("parallel",),
            vmem_limit_bytes=32 << 20),
        cost_estimate=pl.CostEstimate(
            flops=flops, transcendentals=0, bytes_accessed=bytes_accessed),
    )(x, w)

    out = out.reshape((Bp, P))[:B]
    return out.reshape(sizek)


if __name__ == "__main__":
    key = jax.random.PRNGKey(0)
    key_a, key_b = jax.random.split(key)
    shape = (5, 5)

    # pure-JAX reference of the same math
    m0 = jnp.asarray(_moment_matrix(shape[0]), jnp.float32)
    m1 = jnp.asarray(_moment_matrix(shape[1]), jnp.float32)

    def ref_fn(kk):
        return jnp.einsum('ij,...jq,pq->...ip', m0, kk.astype(jnp.float32), m1)

    # 1) module-spec-sized input [batch=2, channels=4, 5, 5]: small-B fast path
    k_small = jax.random.normal(key_a, (2, 4) + shape, dtype=jnp.float32)
    out_small = jax.block_until_ready(k2m(k_small, shape))
    assert out_small.shape == k_small.shape and out_small.dtype == k_small.dtype
    assert jnp.allclose(out_small, ref_fn(k_small), atol=1e-4, rtol=1e-4)

    # 2) same small input forced through the Pallas kernel (partial edge block)
    out_forced = jax.block_until_ready(k2m(k_small, shape, force_pallas=True))
    assert out_forced.shape == k_small.shape and out_forced.dtype == k_small.dtype
    assert jnp.allclose(out_forced, ref_fn(k_small), atol=1e-4, rtol=1e-4)

    # 3) larger batch: lane-packed (5 kernels / 125 lanes per row), 2 grid steps
    k_large = jax.random.normal(key_b, (4, 160) + shape, dtype=jnp.float32)
    out_large = jax.block_until_ready(k2m(k_large, shape))
    assert out_large.shape == k_large.shape and out_large.dtype == k_large.dtype
    assert jnp.allclose(out_large, ref_fn(k_large), atol=1e-4, rtol=1e-4)

    # 4) bf16 path: bf16 x bf16 MXU dot with f32 accumulation
    k_bf16 = k_large.astype(jnp.bfloat16)
    out_bf16 = jax.block_until_ready(k2m(k_bf16, shape))
    assert out_bf16.shape == k_bf16.shape and out_bf16.dtype == jnp.bfloat16
    assert jnp.allclose(out_bf16.astype(jnp.float32), ref_fn(k_bf16),
                        atol=0.25, rtol=0.05)

    print("KERNEL_OK")
</pallas_src>

<mosaic_0001>
module attributes {stable_mosaic.version = 11 : i64} {
  func.func @_k2m_kernel(%arg0: i32, %arg1: memref<8x100xf32, #tpu.memory_space<vmem>>, %arg2: memref<100x100xf32, #tpu.memory_space<vmem>>, %arg3: memref<8x100xf32, #tpu.memory_space<vmem>>) attributes {dimension_semantics = [#tpu.dimension_semantics<parallel>], iteration_bounds = array<i64: 1>, scalar_prefetch = 0 : i64, scratch_operands = 0 : i64, tpu.core_type = #tpu.core_type<tc>, window_params = [{transform_indices = @transform_0, window_bounds = array<i64: 8, 100>}, {pipeline_mode = #tpu.pipeline_mode<synchronous>, transform_indices = @transform_1, window_bounds = array<i64: 100, 100>}, {transform_indices = @transform_2, window_bounds = array<i64: 8, 100>}]} {
    %c0 = arith.constant 0 : index
    %c0_0 = arith.constant 0 : index
    %0 = vector.load %arg1[%c0, %c0_0] : memref<8x100xf32, #tpu.memory_space<vmem>>, vector<8x100xf32>
    %c0_1 = arith.constant 0 : index
    %c0_2 = arith.constant 0 : index
    %1 = vector.load %arg2[%c0_1, %c0_2] : memref<100x100xf32, #tpu.memory_space<vmem>>, vector<100x100xf32>
    %cst = arith.constant dense<0.000000e+00> : vector<8x100xf32>
    %2 = tpu.matmul %0, %1, %cst {dimension_numbers = #tpu.dot_dimension_numbers<[1], [0], [0], [1], [0, 0, 1, 1], [], []>} : vector<8x100xf32>, vector<100x100xf32>, vector<8x100xf32> -> vector<8x100xf32>
    %c0_3 = arith.constant 0 : index
    %c0_4 = arith.constant 0 : index
    %3 = vector.load %arg3[%c0_3, %c0_4] : memref<8x100xf32, #tpu.memory_space<vmem>>, vector<8x100xf32>
    tpu.vector_store %arg3[%c0_3, %c0_4], %2 {strides = array<i32>} : memref<8x100xf32, #tpu.memory_space<vmem>>, vector<8x100xf32>,
    return
  }
  func.func @transform_0(%arg0: i32) -> (i32, i32) {
    %c0_i32 = arith.constant 0 : i32
    %c0_i32_0 = arith.constant 0 : i32
    return %arg0, %c0_i32 : i32, i32
  }
  func.func @transform_1(%arg0: i32) -> (i32, i32) {
    %c0_i32 = arith.constant 0 : i32
    %c0_i32_0 = arith.constant 0 : i32
    %c0_i32_1 = arith.constant 0 : i32
    return %c0_i32, %c0_i32_0 : i32, i32
  }
  func.func @transform_2(%arg0: i32) -> (i32, i32) {
    %c0_i32 = arith.constant 0 : i32
    %c0_i32_0 = arith.constant 0 : i32
    return %arg0, %c0_i32 : i32, i32
  }
}

</mosaic_0001>

<llo_original>
// kernel: tpu_custom_call.1
$region0: #{tpu_custom_call.1}
  #allocation0 [shape = 'u32[]', space=smem, size = 0x4, offset = 0x4, fixed_abs, tag = 'smem constant byte address 0x4 - core index']
  #allocation1 [shape = 'u32[72,128]{1,0:T(1,128)}', space=vmem, size = 0x9000, scoped, tag = 'internal scratch']
  %s0 = inlined_call_operand.hbm [shape: f32[2,100], index: 0, kind: input, shape index: {}]
  %s1 = inlined_call_operand.hbm [shape: f32[100,100], index: 1, kind: input, shape index: {}]
  %s2 = inlined_call_operand.hbm [shape: f32[2,100], index: 2, kind: output, shape index: {}]
  %s3 = sld [smem:[#allocation0]]
  $region26: #{tpu_custom_call.1} parent=0
    _
  %s5 = ssub.s32 1, %s3
  %s6 = scalar_select 0, %s5, %s3
  $region1: #{tpu_custom_call.1} parent=0
    #allocation2 [shape = 'u8[4096]{0}', space=vmem, size = 0x1000, scoped, tag = 'input window, operand 0, single buffered']
    #allocation3 [shape = 's32[1]{0}', space=sflag, size = 0x4, scoped, tag = 'scoped memory for tpu_custom_call.1']
    #allocation4 [shape = 's32[1]{0}', space=sflag, size = 0x4, scoped, tag = 'scoped memory for tpu_custom_call.1']
    #allocation5 [shape = 'u8[53248]{0}', space=vmem, size = 0xd000, scoped, tag = 'input window, operand 1, single buffered']
    #allocation6 [shape = 's32[1]{0}', space=sflag, size = 0x4, scoped, tag = 'scoped memory for tpu_custom_call.1']
    #allocation7 [shape = 'u8[4096]{0}', space=vmem, size = 0x1000, scoped, tag = 'output window, operand 0, single buffered']
    %7 = vsyncpa [#allocation3], 0
    %8 = vsyncpa [#allocation6], 0
    %9 = vsyncpa [#allocation4], 0
    // Predicated region
    $region2: #{tpu_custom_call.1} parent=1 // pred_check
      _
    $region3: #{tpu_custom_call.1} parent=1 // pred_check_branch
      %11 = sbr.rel (0) target = $region5
    $region4: #{tpu_custom_call.1} parent=1 // pred_region
      %13 = vsyncadd [#allocation3], 96
      %s14 = sshll.u32 %s0, 4
      %s15 = int_to_ptr.hbm [resolvable:$true] %s14
      %s16 = sshll.u32 [#allocation2], 4
      %s17 = int_to_ptr.vmem [resolvable:$true] %s16
      %22 = dma.hbm_to_vmem [thread:$0]  %s15, 32, %s17, [#allocation3], 32, 32, 2
    $region5: #{tpu_custom_call.1} parent=1 // pred_fallthru
      _
    // Predicated region
    $region6: #{tpu_custom_call.1} parent=1 // pred_check
      _
    $region7: #{tpu_custom_call.1} parent=1 // pred_check_branch
      %24 = sbr.rel (0) target = $region9
    $region8: #{tpu_custom_call.1} parent=1 // pred_region
      %26 = vsyncadd [#allocation6], 0
      %s27 = sshll.u32 %s1, 4
      %s28 = int_to_ptr.hbm [resolvable:$true] %s27
      %s29 = sshll.u32 [#allocation5], 4
      %s30 = int_to_ptr.vmem [resolvable:$true] %s29
      %35 = dma.hbm_to_vmem [thread:$0]  %s28, 1664, %s30, [#allocation6], 128, 128, 8
    $region9: #{tpu_custom_call.1} parent=1 // pred_fallthru
      _
    // Predicated region
    $region10: #{tpu_custom_call.1} parent=1 // pred_check
      _
    $region11: #{tpu_custom_call.1} parent=1 // pred_check_branch
      %37 = sbr.rel (0) target = $region13
    $region12: #{tpu_custom_call.1} parent=1 // pred_region
      %39 = dma.done [#allocation3], 128
    $region13: #{tpu_custom_call.1} parent=1 // pred_fallthru
      _
    // Predicated region
    $region14: #{tpu_custom_call.1} parent=1 // pred_check
      _
    $region15: #{tpu_custom_call.1} parent=1 // pred_check_branch
      %41 = sbr.rel (0) target = $region17
    $region16: #{tpu_custom_call.1} parent=1 // pred_region
      %43 = dma.done [#allocation6], 1664
    $region17: #{tpu_custom_call.1} parent=1 // pred_fallthru
      _
    %v44 = vld [vmem:[#allocation2] sm:$0xff]
    %v45 = vld [vmem:[#allocation5] sm:$0xff]
    %v46 = vld [vmem:[#allocation5 + $0x8] sm:$0xff]
    %v47 = vld [vmem:[#allocation5 + $0x10] sm:$0xff]
    %v48 = vld [vmem:[#allocation5 + $0x18] sm:$0xff]
    %v49 = vld [vmem:[#allocation5 + $0x20] sm:$0xff]
    %v50 = vld [vmem:[#allocation5 + $0x28] sm:$0xff]
    %v51 = vld [vmem:[#allocation5 + $0x30] sm:$0xff]
    %v52 = vld [vmem:[#allocation5 + $0x38] sm:$0xff]
    %v53 = vld [vmem:[#allocation5 + $0x40] sm:$0xff]
    %v54 = vld [vmem:[#allocation5 + $0x48] sm:$0xff]
    %v55 = vld [vmem:[#allocation5 + $0x50] sm:$0xff]
    %v56 = vld [vmem:[#allocation5 + $0x58] sm:$0xff]
    %v57 = vld [vmem:[#allocation5 + $0x60] sm:$0xf]
    %vm58 = vcmask 818176
    %v60 = vsel %vm58, %v44, 0
    %vm62 = vcmask 1043456
    %v64 = vsel %vm62, %v57, 0
    %66 = vmatpush.msra.mxu0 0.0
    %67 = vmatpush.msra.mxu0 0.0
    %68 = vmatpush.msra.mxu0 0.0
    %69 = vmatpush.msra.mxu0 %v64
    %70 = vmatpush.msra.mxu0 %v56
    %71 = vmatpush.msra.mxu0 %v55
    %72 = vmatpush.msra.mxu0 %v54
    %73 = vmatpush.msra.mxu0 %v53
    %74 = vmatpush.msra.mxu0 %v52
    %75 = vmatpush.msra.mxu0 %v51
    %76 = vmatpush.msra.mxu0 %v50
    %77 = vmatpush.msra.mxu0 %v49
    %78 = vmatpush.msra.mxu0 %v48
    %79 = vmatpush.msra.mxu0 %v47
    %80 = vmatpush.msra.mxu0 %v46
    %81 = vmatpush.msra.mxu0 %v45
    %82 = vmatmul.f32.gmra.mxu0 %v60
    %v83 = vpop.f32.mrf.mxu0
    %v84 = vadd.f32 0.0, %v83
    %85 = vdwg.mxu0
    %86 = vst.msk [vmem:[#allocation7] sm:$0xff] %vm58, %v84
    // Predicated region
    $region18: #{tpu_custom_call.1} parent=1 // pred_check
      _
    $region19: #{tpu_custom_call.1} parent=1 // pred_check_branch
      %88 = sbr.rel (0) target = $region21
    $region20: #{tpu_custom_call.1} parent=1 // pred_region
      %90 = vsyncadd [#allocation4], 96
      %s91 = sshll.u32 [#allocation7], 4
      %s92 = int_to_ptr.vmem [resolvable:$true] %s91
      %s93 = sshll.u32 %s2, 4
      %s94 = int_to_ptr.hbm [resolvable:$true] %s93
      %99 = dma.vmem_to_hbm [thread:$0]  %s92, 32, %s94, [#allocation4], 32, 32, 2
    $region21: #{tpu_custom_call.1} parent=1 // pred_fallthru
      _
    // Predicated region
    $region22: #{tpu_custom_call.1} parent=1 // pred_check
      _
    $region23: #{tpu_custom_call.1} parent=1 // pred_check_branch
      %101 = sbr.rel (0) target = $region25
    $region24: #{tpu_custom_call.1} parent=1 // pred_region
      %103 = dma.done [#allocation4], 128
    $region25: #{tpu_custom_call.1} parent=1 // pred_fallthru
      _
    %104 = vsyncpa [#allocation3], 1
    %105 = vsyncpa [#allocation6], 1
    %106 = vsyncpa [#allocation4], 1

</llo_original>
